<compile_context>
chip_gen: v5e
topology: v5e:2x2
jax: 0.10.0
libtpu: 0.0.40
codegen_flags: <defaults>
</compile_context>

<pallas_src>
import jax
import jax.numpy as jnp
from jax.experimental import pallas as pl
from jax.experimental.pallas import tpu as pltpu


def _round_up(x: int, m: int) -> int:
    return ((x + m - 1) // m) * m


def rnn_receiver_kernel(len_ref, xproj_ref, whh_ref, wag_ref, bag_ref, out_ref):
    """One batch tile: tanh-RNN recurrence + linear agent head.

    len_ref  : [TB, 1]  int32 -- per-sequence valid lengths (padded rows = 0)
    xproj_ref: [T, TB, Hp] f32 -- pre-projected inputs (emb @ W_ih^T + b_ih + b_hh)
    whh_ref  : [Hp, Hp] f32   -- W_hh already transposed ([in, out])
    wag_ref  : [Hp, Op] f32   -- agent weight already transposed
    bag_ref  : [1, Op]  f32   -- agent bias
    out_ref  : [TB, Op] f32
    """
    T = xproj_ref.shape[0]

    lengths = len_ref[...]                       # [TB, 1] int32 (loaded once)
    w_hh_t = whh_ref[...]                        # [Hp, Hp], resident across steps

    # t = 0: previous hidden state is zero, so the recurrent matmul is skipped.
    h = jnp.tanh(xproj_ref[0])                   # [TB, Hp]
    enc = jnp.where(lengths == 1, h, jnp.zeros_like(h))

    # Static unroll over the short, compile-time-constant message length:
    # per step only the serially-dependent [TB,Hp]x[Hp,Hp] MXU matmul + tanh
    # (EUP) + select (VPU) -- the three ops occupy distinct issue slots.
    for t in range(1, T):
        pre = xproj_ref[t] + jnp.dot(h, w_hh_t,
                                     preferred_element_type=jnp.float32)
        h = jnp.tanh(pre)
        # pack_padded_sequence semantics: keep hidden state at step lengths-1.
        enc = jnp.where(lengths == (t + 1), h, enc)

    out_ref[...] = (jnp.dot(enc, wag_ref[...],
                            preferred_element_type=jnp.float32)
                    + bag_ref[...])


def find_lengths(message, eos_id=0):
    """EGG find_lengths: index of first EOS token + 1, capped at T (all int32)."""
    B, T = message.shape
    is_eos = (message == eos_id)
    seen_eos = jnp.cumsum(is_eos.astype(jnp.int32), axis=1) > 0     # [B, T]
    lengths = T - jnp.sum(seen_eos, axis=1).astype(jnp.int32) + 1   # [B]
    return jnp.minimum(lengths, T).astype(jnp.int32)


def rnn_receiver_forward(message, params, lengths=None, batch_tile=None):
    """Forward pass of RnnReceiverDeterministic.

    message: [B, T] int32 token ids
    returns (agent_output [B, O], logits [B], entropy [B])
    """
    emb_table, w_ih, b_ih, w_hh, b_hh, w_ag, b_ag = params
    B, T = message.shape
    H = w_hh.shape[0]
    O = w_ag.shape[0]

    if lengths is None:
        lengths = find_lengths(message)

    f32 = jnp.float32

    # Lane/sublane-dense padded sizes.
    Hp = _round_up(H, 128)
    Op = _round_up(O, 128)
    if batch_tile is None:
        batch_tile = min(128, _round_up(B, 8))
    TB = _round_up(batch_tile, 8)
    Bp = _round_up(B, TB)

    # --- Wrapper-side precompute (one-time, amortized) -----------------------
    # Fold embedding lookup followed by the input projection (+ both biases)
    # into a single [V, Hp] table, then gather per token -> [T, Bp, Hp].
    proj_table = (emb_table.astype(f32) @ w_ih.astype(f32).T
                  + b_ih.astype(f32) + b_hh.astype(f32))            # [V, H]
    proj_table = jnp.pad(proj_table, ((0, 0), (0, Hp - H)))          # [V, Hp]

    x_proj = jnp.take(proj_table, message, axis=0)                   # [B, T, Hp]
    x_proj = jnp.transpose(x_proj, (1, 0, 2))                        # [T, B, Hp]
    x_proj = jnp.pad(x_proj, ((0, 0), (0, Bp - B), (0, 0)))          # [T, Bp, Hp]

    # Pre-transposed, zero-padded weights (padding lanes stay zero throughout).
    w_hh_t = jnp.pad(w_hh.astype(f32).T, ((0, Hp - H), (0, Hp - H)))  # [Hp, Hp]
    w_ag_t = jnp.pad(w_ag.astype(f32).T, ((0, Hp - H), (0, Op - O)))  # [Hp, Op]
    b_ag2 = jnp.pad(b_ag.astype(f32).reshape(1, O), ((0, 0), (0, Op - O)))

    # Padded batch rows get length 0 -> encoding stays zero; sliced off below.
    len2d = jnp.pad(jnp.clip(lengths.astype(jnp.int32), 0, T).reshape(B, 1),
                    ((0, Bp - B), (0, 0)))                            # [Bp, 1]

    grid = (Bp // TB,)

    cost = pl.CostEstimate(
        flops=2 * T * Bp * Hp * Hp + 2 * Bp * Hp * Op,
        transcendentals=T * Bp * Hp,
        bytes_accessed=4 * (T * Bp * Hp + Hp * Hp + Hp * Op + Bp * Op + Bp),
    )
    # Per-tile VMEM: double-buffered activations/outputs + resident weights.
    vmem_needed = 4 * (2 * (T * TB * Hp + TB * Op + TB)
                       + Hp * Hp + Hp * Op + Op)
    vmem_limit = min(128 * 1024 * 1024,
                     max(32 * 1024 * 1024, int(vmem_needed * 2)))

    out_padded = pl.pallas_call(
        rnn_receiver_kernel,
        out_shape=jax.ShapeDtypeStruct((Bp, Op), jnp.float32),
        grid=grid,
        in_specs=[
            pl.BlockSpec((TB, 1), lambda i: (i, 0)),         # lengths (batch tile)
            pl.BlockSpec((T, TB, Hp), lambda i: (0, i, 0)),  # pre-projected inputs
            pl.BlockSpec((Hp, Hp), lambda i: (0, 0)),        # W_hh^T (resident)
            pl.BlockSpec((Hp, Op), lambda i: (0, 0)),        # W_ag^T (resident)
            pl.BlockSpec((1, Op), lambda i: (0, 0)),         # b_ag   (resident)
        ],
        out_specs=pl.BlockSpec((TB, Op), lambda i: (i, 0)),
        compiler_params=pltpu.CompilerParams(
            dimension_semantics=("parallel",),
            vmem_limit_bytes=vmem_limit,
        ),
        cost_estimate=cost,
    )(len2d, x_proj, w_hh_t, w_ag_t, b_ag2)

    agent_output = out_padded[:B, :O]
    logits = jnp.zeros((B,), jnp.float32)
    entropy = logits
    return agent_output, logits, entropy


def reference_forward(message, params, lengths):
    """Pure-JAX reference mirroring the PyTorch module (for correctness check)."""
    emb_table, w_ih, b_ih, w_hh, b_hh, w_ag, b_ag = params
    B, T = message.shape
    H = w_hh.shape[0]
    emb = jnp.take(emb_table, message, axis=0)  # [B, T, E]
    h = jnp.zeros((B, H), jnp.float32)
    enc = jnp.zeros((B, H), jnp.float32)
    for t in range(T):
        h = jnp.tanh(emb[:, t] @ w_ih.T + b_ih + h @ w_hh.T + b_hh)
        enc = jnp.where((lengths == t + 1)[:, None], h, enc)
    out = enc @ w_ag.T + b_ag
    return out, jnp.zeros((B,), jnp.float32), jnp.zeros((B,), jnp.float32)


def make_params(key, vocab_size, embed_dim, hidden_size, out_dim):
    ks = jax.random.split(key, 7)
    bound = 1.0 / jnp.sqrt(hidden_size)
    emb_table = jax.random.normal(ks[0], (vocab_size, embed_dim), jnp.float32)
    w_ih = jax.random.uniform(ks[1], (hidden_size, embed_dim), jnp.float32, -bound, bound)
    b_ih = jax.random.uniform(ks[2], (hidden_size,), jnp.float32, -bound, bound)
    w_hh = jax.random.uniform(ks[3], (hidden_size, hidden_size), jnp.float32, -bound, bound)
    b_hh = jax.random.uniform(ks[4], (hidden_size,), jnp.float32, -bound, bound)
    w_ag = jax.random.uniform(ks[5], (out_dim, hidden_size), jnp.float32, -bound, bound)
    b_ag = jax.random.uniform(ks[6], (out_dim,), jnp.float32, -bound, bound)
    return (emb_table, w_ih, b_ih, w_hh, b_hh, w_ag, b_ag)


if __name__ == "__main__":
    B, T = 4, 8
    vocab_size, embed_dim, hidden_size, out_dim = 10, 32, 32, 16

    key = jax.random.PRNGKey(0)
    k_msg, k_par = jax.random.split(key)
    message = jax.random.randint(k_msg, (B, T), 0, vocab_size, dtype=jnp.int32)
    lengths = jnp.array([8, 5, 8, 3], dtype=jnp.int32)
    params = make_params(k_par, vocab_size, embed_dim, hidden_size, out_dim)

    # Explicit-lengths path (matches PyTorch pack_padded_sequence semantics).
    agent_out, logits, entropy = rnn_receiver_forward(message, params, lengths)
    agent_out = jax.block_until_ready(agent_out)
    logits = jax.block_until_ready(logits)
    entropy = jax.block_until_ready(entropy)

    ref_out, ref_logits, ref_ent = reference_forward(message, params, lengths)
    assert agent_out.shape == (B, out_dim)
    assert logits.shape == (B,) and entropy.shape == (B,)
    assert jnp.allclose(agent_out, ref_out, rtol=1e-3, atol=1e-3)
    assert jnp.all(logits == 0.0) and jnp.all(entropy == 0.0)

    # lengths=None path (EGG find_lengths on EOS token id 0).
    auto_lengths = find_lengths(message)
    agent_out2, _, _ = rnn_receiver_forward(message, params, lengths=None)
    agent_out2 = jax.block_until_ready(agent_out2)
    ref_out2, _, _ = reference_forward(message, params, auto_lengths)
    assert jnp.allclose(agent_out2, ref_out2, rtol=1e-3, atol=1e-3)

    print("KERNEL_OK")
</pallas_src>

<mosaic_0001>
module attributes {stable_mosaic.version = 11 : i64} {
  func.func @rnn_receiver_kernel(%arg0: i32, %arg1: memref<8x1xi32, #tpu.memory_space<vmem>>, %arg2: memref<8x8x128xf32, #tpu.memory_space<vmem>>, %arg3: memref<128x128xf32, #tpu.memory_space<vmem>>, %arg4: memref<128x128xf32, #tpu.memory_space<vmem>>, %arg5: memref<1x128xf32, #tpu.memory_space<vmem>>, %arg6: memref<8x128xf32, #tpu.memory_space<vmem>>) attributes {dimension_semantics = [#tpu.dimension_semantics<parallel>], iteration_bounds = array<i64: 1>, scalar_prefetch = 0 : i64, scratch_operands = 0 : i64, tpu.core_type = #tpu.core_type<tc>, window_params = [{transform_indices = @transform_0, window_bounds = array<i64: 8, 1>}, {transform_indices = @transform_1, window_bounds = array<i64: 8, 8, 128>}, {pipeline_mode = #tpu.pipeline_mode<synchronous>, transform_indices = @transform_2, window_bounds = array<i64: 128, 128>}, {pipeline_mode = #tpu.pipeline_mode<synchronous>, transform_indices = @transform_3, window_bounds = array<i64: 128, 128>}, {pipeline_mode = #tpu.pipeline_mode<synchronous>, transform_indices = @transform_4, window_bounds = array<i64: 1, 128>}, {transform_indices = @transform_5, window_bounds = array<i64: 8, 128>}]} {
    %c0 = arith.constant 0 : index
    %c0_0 = arith.constant 0 : index
    %0 = vector.load %arg1[%c0, %c0_0] : memref<8x1xi32, #tpu.memory_space<vmem>>, vector<8x1xi32>
    %c0_1 = arith.constant 0 : index
    %c0_2 = arith.constant 0 : index
    %1 = vector.load %arg3[%c0_1, %c0_2] : memref<128x128xf32, #tpu.memory_space<vmem>>, vector<128x128xf32>
    %c0_3 = arith.constant 0 : index
    %c0_4 = arith.constant 0 : index
    %c0_5 = arith.constant 0 : index
    %2 = vector.load %arg2[%c0_3, %c0_4, %c0_5] : memref<8x8x128xf32, #tpu.memory_space<vmem>>, vector<1x8x128xf32>
    %3 = vector.shape_cast %2 : vector<1x8x128xf32> to vector<8x128xf32>
    %4 = math.tanh %3 : vector<8x128xf32>
    %c1_i32 = arith.constant 1 : i32
    %5 = vector.broadcast %c1_i32 : i32 to vector<8x1xi32>
    %6 = arith.cmpi eq, %0, %5 : vector<8x1xi32>
    %cst = arith.constant 0.000000e+00 : f32
    %7 = vector.broadcast %cst : f32 to vector<8x128xf32>
    %8 = vector.shape_cast %6 : vector<8x1xi1> to vector<8x1xi1>
    %9 = vector.broadcast %8 : vector<8x1xi1> to vector<8x128xi1>
    %10 = arith.select %9, %4, %7 : vector<8x128xi1>, vector<8x128xf32>
    %c1 = arith.constant 1 : index
    %c0_6 = arith.constant 0 : index
    %c0_7 = arith.constant 0 : index
    %11 = vector.load %arg2[%c1, %c0_6, %c0_7] : memref<8x8x128xf32, #tpu.memory_space<vmem>>, vector<1x8x128xf32>
    %12 = vector.shape_cast %11 : vector<1x8x128xf32> to vector<8x128xf32>
    %cst_8 = arith.constant dense<0.000000e+00> : vector<8x128xf32>
    %13 = tpu.matmul %4, %1, %cst_8 {dimension_numbers = #tpu.dot_dimension_numbers<[1], [0], [0], [1], [0, 0, 1, 1], [], []>} : vector<8x128xf32>, vector<128x128xf32>, vector<8x128xf32> -> vector<8x128xf32>
    %14 = arith.addf %12, %13 : vector<8x128xf32>
    %15 = math.tanh %14 : vector<8x128xf32>
    %c2_i32 = arith.constant 2 : i32
    %16 = vector.broadcast %c2_i32 : i32 to vector<8x1xi32>
    %17 = arith.cmpi eq, %0, %16 : vector<8x1xi32>
    %18 = vector.shape_cast %17 : vector<8x1xi1> to vector<8x1xi1>
    %19 = vector.broadcast %18 : vector<8x1xi1> to vector<8x128xi1>
    %20 = arith.select %19, %15, %10 : vector<8x128xi1>, vector<8x128xf32>
    %c2 = arith.constant 2 : index
    %c0_9 = arith.constant 0 : index
    %c0_10 = arith.constant 0 : index
    %21 = vector.load %arg2[%c2, %c0_9, %c0_10] : memref<8x8x128xf32, #tpu.memory_space<vmem>>, vector<1x8x128xf32>
    %22 = vector.shape_cast %21 : vector<1x8x128xf32> to vector<8x128xf32>
    %cst_11 = arith.constant dense<0.000000e+00> : vector<8x128xf32>
    %23 = tpu.matmul %15, %1, %cst_11 {dimension_numbers = #tpu.dot_dimension_numbers<[1], [0], [0], [1], [0, 0, 1, 1], [], []>} : vector<8x128xf32>, vector<128x128xf32>, vector<8x128xf32> -> vector<8x128xf32>
    %24 = arith.addf %22, %23 : vector<8x128xf32>
    %25 = math.tanh %24 : vector<8x128xf32>
    %c3_i32 = arith.constant 3 : i32
    %26 = vector.broadcast %c3_i32 : i32 to vector<8x1xi32>
    %27 = arith.cmpi eq, %0, %26 : vector<8x1xi32>
    %28 = vector.shape_cast %27 : vector<8x1xi1> to vector<8x1xi1>
    %29 = vector.broadcast %28 : vector<8x1xi1> to vector<8x128xi1>
    %30 = arith.select %29, %25, %20 : vector<8x128xi1>, vector<8x128xf32>
    %c3 = arith.constant 3 : index
    %c0_12 = arith.constant 0 : index
    %c0_13 = arith.constant 0 : index
    %31 = vector.load %arg2[%c3, %c0_12, %c0_13] : memref<8x8x128xf32, #tpu.memory_space<vmem>>, vector<1x8x128xf32>
    %32 = vector.shape_cast %31 : vector<1x8x128xf32> to vector<8x128xf32>
    %cst_14 = arith.constant dense<0.000000e+00> : vector<8x128xf32>
    %33 = tpu.matmul %25, %1, %cst_14 {dimension_numbers = #tpu.dot_dimension_numbers<[1], [0], [0], [1], [0, 0, 1, 1], [], []>} : vector<8x128xf32>, vector<128x128xf32>, vector<8x128xf32> -> vector<8x128xf32>
    %34 = arith.addf %32, %33 : vector<8x128xf32>
    %35 = math.tanh %34 : vector<8x128xf32>
    %c4_i32 = arith.constant 4 : i32
    %36 = vector.broadcast %c4_i32 : i32 to vector<8x1xi32>
    %37 = arith.cmpi eq, %0, %36 : vector<8x1xi32>
    %38 = vector.shape_cast %37 : vector<8x1xi1> to vector<8x1xi1>
    %39 = vector.broadcast %38 : vector<8x1xi1> to vector<8x128xi1>
    %40 = arith.select %39, %35, %30 : vector<8x128xi1>, vector<8x128xf32>
    %c4 = arith.constant 4 : index
    %c0_15 = arith.constant 0 : index
    %c0_16 = arith.constant 0 : index
    %41 = vector.load %arg2[%c4, %c0_15, %c0_16] : memref<8x8x128xf32, #tpu.memory_space<vmem>>, vector<1x8x128xf32>
    %42 = vector.shape_cast %41 : vector<1x8x128xf32> to vector<8x128xf32>
    %cst_17 = arith.constant dense<0.000000e+00> : vector<8x128xf32>
    %43 = tpu.matmul %35, %1, %cst_17 {dimension_numbers = #tpu.dot_dimension_numbers<[1], [0], [0], [1], [0, 0, 1, 1], [], []>} : vector<8x128xf32>, vector<128x128xf32>, vector<8x128xf32> -> vector<8x128xf32>
    %44 = arith.addf %42, %43 : vector<8x128xf32>
    %45 = math.tanh %44 : vector<8x128xf32>
    %c5_i32 = arith.constant 5 : i32
    %46 = vector.broadcast %c5_i32 : i32 to vector<8x1xi32>
    %47 = arith.cmpi eq, %0, %46 : vector<8x1xi32>
    %48 = vector.shape_cast %47 : vector<8x1xi1> to vector<8x1xi1>
    %49 = vector.broadcast %48 : vector<8x1xi1> to vector<8x128xi1>
    %50 = arith.select %49, %45, %40 : vector<8x128xi1>, vector<8x128xf32>
    %c5 = arith.constant 5 : index
    %c0_18 = arith.constant 0 : index
    %c0_19 = arith.constant 0 : index
    %51 = vector.load %arg2[%c5, %c0_18, %c0_19] : memref<8x8x128xf32, #tpu.memory_space<vmem>>, vector<1x8x128xf32>
    %52 = vector.shape_cast %51 : vector<1x8x128xf32> to vector<8x128xf32>
    %cst_20 = arith.constant dense<0.000000e+00> : vector<8x128xf32>
    %53 = tpu.matmul %45, %1, %cst_20 {dimension_numbers = #tpu.dot_dimension_numbers<[1], [0], [0], [1], [0, 0, 1, 1], [], []>} : vector<8x128xf32>, vector<128x128xf32>, vector<8x128xf32> -> vector<8x128xf32>
    %54 = arith.addf %52, %53 : vector<8x128xf32>
    %55 = math.tanh %54 : vector<8x128xf32>
    %c6_i32 = arith.constant 6 : i32
    %56 = vector.broadcast %c6_i32 : i32 to vector<8x1xi32>
    %57 = arith.cmpi eq, %0, %56 : vector<8x1xi32>
    %58 = vector.shape_cast %57 : vector<8x1xi1> to vector<8x1xi1>
    %59 = vector.broadcast %58 : vector<8x1xi1> to vector<8x128xi1>
    %60 = arith.select %59, %55, %50 : vector<8x128xi1>, vector<8x128xf32>
    %c6 = arith.constant 6 : index
    %c0_21 = arith.constant 0 : index
    %c0_22 = arith.constant 0 : index
    %61 = vector.load %arg2[%c6, %c0_21, %c0_22] : memref<8x8x128xf32, #tpu.memory_space<vmem>>, vector<1x8x128xf32>
    %62 = vector.shape_cast %61 : vector<1x8x128xf32> to vector<8x128xf32>
    %cst_23 = arith.constant dense<0.000000e+00> : vector<8x128xf32>
    %63 = tpu.matmul %55, %1, %cst_23 {dimension_numbers = #tpu.dot_dimension_numbers<[1], [0], [0], [1], [0, 0, 1, 1], [], []>} : vector<8x128xf32>, vector<128x128xf32>, vector<8x128xf32> -> vector<8x128xf32>
    %64 = arith.addf %62, %63 : vector<8x128xf32>
    %65 = math.tanh %64 : vector<8x128xf32>
    %c7_i32 = arith.constant 7 : i32
    %66 = vector.broadcast %c7_i32 : i32 to vector<8x1xi32>
    %67 = arith.cmpi eq, %0, %66 : vector<8x1xi32>
    %68 = vector.shape_cast %67 : vector<8x1xi1> to vector<8x1xi1>
    %69 = vector.broadcast %68 : vector<8x1xi1> to vector<8x128xi1>
    %70 = arith.select %69, %65, %60 : vector<8x128xi1>, vector<8x128xf32>
    %c7 = arith.constant 7 : index
    %c0_24 = arith.constant 0 : index
    %c0_25 = arith.constant 0 : index
    %71 = vector.load %arg2[%c7, %c0_24, %c0_25] : memref<8x8x128xf32, #tpu.memory_space<vmem>>, vector<1x8x128xf32>
    %72 = vector.shape_cast %71 : vector<1x8x128xf32> to vector<8x128xf32>
    %cst_26 = arith.constant dense<0.000000e+00> : vector<8x128xf32>
    %73 = tpu.matmul %65, %1, %cst_26 {dimension_numbers = #tpu.dot_dimension_numbers<[1], [0], [0], [1], [0, 0, 1, 1], [], []>} : vector<8x128xf32>, vector<128x128xf32>, vector<8x128xf32> -> vector<8x128xf32>
    %74 = arith.addf %72, %73 : vector<8x128xf32>
    %75 = math.tanh %74 : vector<8x128xf32>
    %c8_i32 = arith.constant 8 : i32
    %76 = vector.broadcast %c8_i32 : i32 to vector<8x1xi32>
    %77 = arith.cmpi eq, %0, %76 : vector<8x1xi32>
    %78 = vector.shape_cast %77 : vector<8x1xi1> to vector<8x1xi1>
    %79 = vector.broadcast %78 : vector<8x1xi1> to vector<8x128xi1>
    %80 = arith.select %79, %75, %70 : vector<8x128xi1>, vector<8x128xf32>
    %c0_27 = arith.constant 0 : index
    %c0_28 = arith.constant 0 : index
    %81 = vector.load %arg4[%c0_27, %c0_28] : memref<128x128xf32, #tpu.memory_space<vmem>>, vector<128x128xf32>
    %cst_29 = arith.constant dense<0.000000e+00> : vector<8x128xf32>
    %82 = tpu.matmul %80, %81, %cst_29 {dimension_numbers = #tpu.dot_dimension_numbers<[1], [0], [0], [1], [0, 0, 1, 1], [], []>} : vector<8x128xf32>, vector<128x128xf32>, vector<8x128xf32> -> vector<8x128xf32>
    %c0_30 = arith.constant 0 : index
    %c0_31 = arith.constant 0 : index
    %83 = vector.load %arg5[%c0_30, %c0_31] : memref<1x128xf32, #tpu.memory_space<vmem>>, vector<1x128xf32>
    %84 = vector.broadcast %83 : vector<1x128xf32> to vector<8x128xf32>
    %85 = arith.addf %82, %84 : vector<8x128xf32>
    %c0_32 = arith.constant 0 : index
    %c0_33 = arith.constant 0 : index
    %86 = vector.load %arg6[%c0_32, %c0_33] : memref<8x128xf32, #tpu.memory_space<vmem>>, vector<8x128xf32>
    tpu.vector_store %arg6[%c0_32, %c0_33], %85 {strides = array<i32>} : memref<8x128xf32, #tpu.memory_space<vmem>>, vector<8x128xf32>,
    return
  }
  func.func @transform_0(%arg0: i32) -> (i32, i32) {
    %c0_i32 = arith.constant 0 : i32
    %c0_i32_0 = arith.constant 0 : i32
    return %arg0, %c0_i32 : i32, i32
  }
  func.func @transform_1(%arg0: i32) -> (i32, i32, i32) {
    %c0_i32 = arith.constant 0 : i32
    %c0_i32_0 = arith.constant 0 : i32
    %c0_i32_1 = arith.constant 0 : i32
    return %c0_i32, %arg0, %c0_i32_0 : i32, i32, i32
  }
  func.func @transform_2(%arg0: i32) -> (i32, i32) {
    %c0_i32 = arith.constant 0 : i32
    %c0_i32_0 = arith.constant 0 : i32
    %c0_i32_1 = arith.constant 0 : i32
    return %c0_i32, %c0_i32_0 : i32, i32
  }
  func.func @transform_3(%arg0: i32) -> (i32, i32) {
    %c0_i32 = arith.constant 0 : i32
    %c0_i32_0 = arith.constant 0 : i32
    %c0_i32_1 = arith.constant 0 : i32
    return %c0_i32, %c0_i32_0 : i32, i32
  }
  func.func @transform_4(%arg0: i32) -> (i32, i32) {
    %c0_i32 = arith.constant 0 : i32
    %c0_i32_0 = arith.constant 0 : i32
    %c0_i32_1 = arith.constant 0 : i32
    return %c0_i32, %c0_i32_0 : i32, i32
  }
  func.func @transform_5(%arg0: i32) -> (i32, i32) {
    %c0_i32 = arith.constant 0 : i32
    %c0_i32_0 = arith.constant 0 : i32
    return %arg0, %c0_i32 : i32, i32
  }
}

</mosaic_0001>

<llo_original>
// kernel: tpu_custom_call.1
$region0: #{tpu_custom_call.1}
  #allocation0 [shape = 'u32[]', space=smem, size = 0x4, offset = 0x4, fixed_abs, tag = 'smem constant byte address 0x4 - core index']
  #allocation1 [shape = 'u32[72,128]{1,0:T(1,128)}', space=vmem, size = 0x9000, scoped, tag = 'internal scratch']
  %s0 = inlined_call_operand.vmem [shape: s32[8,1], index: 0, kind: input, shape index: {}]
  %s1 = inlined_call_operand.hbm [shape: f32[8,8,128], index: 1, kind: input, shape index: {}]
  %s2 = inlined_call_operand.hbm [shape: f32[128,128], index: 2, kind: input, shape index: {}]
  %s3 = inlined_call_operand.hbm [shape: f32[128,128], index: 3, kind: input, shape index: {}]
  %s4 = inlined_call_operand.vmem [shape: f32[1,128], index: 4, kind: input, shape index: {}]
  %s5 = inlined_call_operand.hbm [shape: f32[8,128], index: 5, kind: output, shape index: {}]
  %s6 = sld [smem:[#allocation0]]
  $region42: #{tpu_custom_call.1} parent=0
    _
  %s8 = ssub.s32 1, %s6
  %s9 = scalar_select 0, %s8, %s6
  $region1: #{tpu_custom_call.1} parent=0
    #allocation2 [shape = 'u8[32768]{0}', space=vmem, size = 0x8000, scoped, tag = 'input window, operand 1, single buffered']
    #allocation3 [shape = 's32[1]{0}', space=sflag, size = 0x4, scoped, tag = 'scoped memory for tpu_custom_call.1']
    #allocation4 [shape = 's32[1]{0}', space=sflag, size = 0x4, scoped, tag = 'scoped memory for tpu_custom_call.1']
    #allocation5 [shape = 'u8[65536]{0}', space=vmem, size = 0x10000, scoped, tag = 'input window, operand 2, single buffered']
    #allocation6 [shape = 's32[1]{0}', space=sflag, size = 0x4, scoped, tag = 'scoped memory for tpu_custom_call.1']
    #allocation7 [shape = 'u8[65536]{0}', space=vmem, size = 0x10000, scoped, tag = 'input window, operand 3, single buffered']
    #allocation8 [shape = 'u8[4096]{0}', space=vmem, size = 0x1000, scoped, tag = 'output window, operand 0, single buffered']
    %10 = vsyncpa [#allocation3], 0
    %11 = vsyncpa [#allocation6], 0
    %12 = vsyncpa [#allocation4], 0
    // Predicated region
    $region2: #{tpu_custom_call.1} parent=1 // pred_check
      _
    $region3: #{tpu_custom_call.1} parent=1 // pred_check_branch
      %14 = sbr.rel (0) target = $region5
    $region4: #{tpu_custom_call.1} parent=1 // pred_region
      _
    $region5: #{tpu_custom_call.1} parent=1 // pred_fallthru
      _
    // Predicated region
    $region6: #{tpu_custom_call.1} parent=1 // pred_check
      _
    $region7: #{tpu_custom_call.1} parent=1 // pred_check_branch
      %16 = sbr.rel (0) target = $region9
    $region8: #{tpu_custom_call.1} parent=1 // pred_region
      %18 = vsyncadd [#allocation3], 0
      %s19 = sshll.u32 %s1, 4
      %s20 = int_to_ptr.hbm [resolvable:$true] %s19
      %s21 = sshll.u32 [#allocation2], 4
      %s22 = int_to_ptr.vmem [resolvable:$true] %s21
      %27 = dma.hbm_to_vmem [thread:$0]  %s20, 1024, %s22, [#allocation3], 128, 128, 8
    $region9: #{tpu_custom_call.1} parent=1 // pred_fallthru
      _
    // Predicated region
    $region10: #{tpu_custom_call.1} parent=1 // pred_check
      _
    $region11: #{tpu_custom_call.1} parent=1 // pred_check_branch
      %29 = sbr.rel (0) target = $region13
    $region12: #{tpu_custom_call.1} parent=1 // pred_region
      %31 = vsyncadd [#allocation6], 0
      %s32 = sshll.u32 %s2, 4
      %s33 = int_to_ptr.hbm [resolvable:$true] %s32
      %s34 = sshll.u32 [#allocation5], 4
      %s35 = int_to_ptr.vmem [resolvable:$true] %s34
      %40 = dma.hbm_to_vmem [thread:$0]  %s33, 2048, %s35, [#allocation6], 128, 128, 8
    $region13: #{tpu_custom_call.1} parent=1 // pred_fallthru
      _
    // Predicated region
    $region14: #{tpu_custom_call.1} parent=1 // pred_check
      _
    $region15: #{tpu_custom_call.1} parent=1 // pred_check_branch
      %42 = sbr.rel (0) target = $region17
    $region16: #{tpu_custom_call.1} parent=1 // pred_region
      %44 = vsyncadd [#allocation6], 0
      %s45 = sshll.u32 %s3, 4
      %s46 = int_to_ptr.hbm [resolvable:$true] %s45
      %s47 = sshll.u32 [#allocation7], 4
      %s48 = int_to_ptr.vmem [resolvable:$true] %s47
      %53 = dma.hbm_to_vmem [thread:$0]  %s46, 2048, %s48, [#allocation6], 128, 128, 8
    $region17: #{tpu_custom_call.1} parent=1 // pred_fallthru
      _
    // Predicated region
    $region18: #{tpu_custom_call.1} parent=1 // pred_check
      _
    $region19: #{tpu_custom_call.1} parent=1 // pred_check_branch
      %55 = sbr.rel (0) target = $region21
    $region20: #{tpu_custom_call.1} parent=1 // pred_region
      _
    $region21: #{tpu_custom_call.1} parent=1 // pred_fallthru
      _
    // Predicated region
    $region22: #{tpu_custom_call.1} parent=1 // pred_check
      _
    $region23: #{tpu_custom_call.1} parent=1 // pred_check_branch
      %57 = sbr.rel (0) target = $region25
    $region24: #{tpu_custom_call.1} parent=1 // pred_region
      %59 = dma.done [#allocation3], 1024
    $region25: #{tpu_custom_call.1} parent=1 // pred_fallthru
      _
    // Predicated region
    $region26: #{tpu_custom_call.1} parent=1 // pred_check
      _
    $region27: #{tpu_custom_call.1} parent=1 // pred_check_branch
      %61 = sbr.rel (0) target = $region29
    $region28: #{tpu_custom_call.1} parent=1 // pred_region
      %63 = dma.done [#allocation6], 2048
    $region29: #{tpu_custom_call.1} parent=1 // pred_fallthru
      _
    // Predicated region
    $region30: #{tpu_custom_call.1} parent=1 // pred_check
      _
    $region31: #{tpu_custom_call.1} parent=1 // pred_check_branch
      %65 = sbr.rel (0) target = $region33
    $region32: #{tpu_custom_call.1} parent=1 // pred_region
      %67 = dma.done [#allocation6], 2048
    $region33: #{tpu_custom_call.1} parent=1 // pred_fallthru
      _
    %v68 = vld [vmem:[%s0] sm:$0xff]
    %v69 = vld [vmem:[#allocation5] sm:$0xff]
    %v70 = vld [vmem:[#allocation5 + $0x8] sm:$0xff]
    %v71 = vld [vmem:[#allocation5 + $0x10] sm:$0xff]
    %v72 = vld [vmem:[#allocation5 + $0x18] sm:$0xff]
    %v73 = vld [vmem:[#allocation5 + $0x20] sm:$0xff]
    %v74 = vld [vmem:[#allocation5 + $0x28] sm:$0xff]
    %v75 = vld [vmem:[#allocation5 + $0x30] sm:$0xff]
    %v76 = vld [vmem:[#allocation5 + $0x38] sm:$0xff]
    %v77 = vld [vmem:[#allocation5 + $0x40] sm:$0xff]
    %v78 = vld [vmem:[#allocation5 + $0x48] sm:$0xff]
    %v79 = vld [vmem:[#allocation5 + $0x50] sm:$0xff]
    %v80 = vld [vmem:[#allocation5 + $0x58] sm:$0xff]
    %v81 = vld [vmem:[#allocation5 + $0x60] sm:$0xff]
    %v82 = vld [vmem:[#allocation5 + $0x68] sm:$0xff]
    %v83 = vld [vmem:[#allocation5 + $0x70] sm:$0xff]
    %v84 = vld [vmem:[#allocation5 + $0x78] sm:$0xff]
    %v85 = vld [vmem:[#allocation2] sm:$0xff]
    %v86 = vtanh.pop %v85
    %vm87 = vcmp.eq.s32.totalorder %v68, 1
    %v88 = vsel %vm87, 1, 0
    %89 = vset.pattern.permute.xlu0 0
    %90 = vperm.xlu0 %89, %v88
    %v91 = vpop.permute.xlu0 %90
    %vm92 = vcmp.eq.s32.totalorder %v91, 1
    %v93 = vsel %vm92, %v86, 0.0
    %s94 = scalar_lea.vmem [#allocation2], 8
    %v95 = vld [vmem:[%s94] sm:$0xff]
    %96 = vmatpush.msra.mxu0 %v84
    %97 = vmatpush.msra.mxu0 %v83
    %98 = vmatpush.msra.mxu0 %v82
    %99 = vmatpush.msra.mxu0 %v81
    %100 = vmatpush.msra.mxu0 %v80
    %101 = vmatpush.msra.mxu0 %v79
    %102 = vmatpush.msra.mxu0 %v78
    %103 = vmatpush.msra.mxu0 %v77
    %104 = vmatpush.msra.mxu0 %v76
    %105 = vmatpush.msra.mxu0 %v75
    %106 = vmatpush.msra.mxu0 %v74
    %107 = vmatpush.msra.mxu0 %v73
    %108 = vmatpush.msra.mxu0 %v72
    %109 = vmatpush.msra.mxu0 %v71
    %110 = vmatpush.msra.mxu0 %v70
    %111 = vmatpush.msra.mxu0 %v69
    %112 = vmatmul.f32.gmra.mxu0 %v86
    %v113 = vpop.f32.mrf.mxu0
    %v114 = vadd.f32 0.0, %v113
    %115 = vdwg.mxu0
    %v116 = vadd.f32 %v95, %v114
    %v117 = vtanh.pop %v116
    %vm118 = vcmp.eq.s32.totalorder %v68, 2
    %v119 = vsel %vm118, 1, 0
    %120 = vset.pattern.permute.xlu0 0
    %121 = vperm.xlu0 %120, %v119
    %v122 = vpop.permute.xlu0 %121
    %vm123 = vcmp.eq.s32.totalorder %v122, 1
    %v124 = vsel %vm123, %v117, %v93
    %s125 = scalar_lea.vmem [#allocation2], 16
    %v126 = vld [vmem:[%s125] sm:$0xff]
    %127 = vmatpush.msra.mxu0 %v84
    %128 = vmatpush.msra.mxu0 %v83
    %129 = vmatpush.msra.mxu0 %v82
    %130 = vmatpush.msra.mxu0 %v81
    %131 = vmatpush.msra.mxu0 %v80
    %132 = vmatpush.msra.mxu0 %v79
    %133 = vmatpush.msra.mxu0 %v78
    %134 = vmatpush.msra.mxu0 %v77
    %135 = vmatpush.msra.mxu0 %v76
    %136 = vmatpush.msra.mxu0 %v75
    %137 = vmatpush.msra.mxu0 %v74
    %138 = vmatpush.msra.mxu0 %v73
    %139 = vmatpush.msra.mxu0 %v72
    %140 = vmatpush.msra.mxu0 %v71
    %141 = vmatpush.msra.mxu0 %v70
    %142 = vmatpush.msra.mxu0 %v69
    %143 = vmatmul.f32.gmra.mxu0 %v117
    %v144 = vpop.f32.mrf.mxu0
    %v145 = vadd.f32 0.0, %v144
    %146 = vdwg.mxu0
    %v147 = vadd.f32 %v126, %v145
    %v148 = vtanh.pop %v147
    %vm149 = vcmp.eq.s32.totalorder %v68, 3
    %v150 = vsel %vm149, 1, 0
    %151 = vset.pattern.permute.xlu0 0
    %152 = vperm.xlu0 %151, %v150
    %v153 = vpop.permute.xlu0 %152
    %vm154 = vcmp.eq.s32.totalorder %v153, 1
    %v155 = vsel %vm154, %v148, %v124
    %s156 = scalar_lea.vmem [#allocation2], 24
    %v157 = vld [vmem:[%s156] sm:$0xff]
    %158 = vmatpush.msra.mxu0 %v84
    %159 = vmatpush.msra.mxu0 %v83
    %160 = vmatpush.msra.mxu0 %v82
    %161 = vmatpush.msra.mxu0 %v81
    %162 = vmatpush.msra.mxu0 %v80
    %163 = vmatpush.msra.mxu0 %v79
    %164 = vmatpush.msra.mxu0 %v78
    %165 = vmatpush.msra.mxu0 %v77
    %166 = vmatpush.msra.mxu0 %v76
    %167 = vmatpush.msra.mxu0 %v75
    %168 = vmatpush.msra.mxu0 %v74
    %169 = vmatpush.msra.mxu0 %v73
    %170 = vmatpush.msra.mxu0 %v72
    %171 = vmatpush.msra.mxu0 %v71
    %172 = vmatpush.msra.mxu0 %v70
    %173 = vmatpush.msra.mxu0 %v69
    %174 = vmatmul.f32.gmra.mxu0 %v148
    %v175 = vpop.f32.mrf.mxu0
    %v176 = vadd.f32 0.0, %v175
    %177 = vdwg.mxu0
    %v178 = vadd.f32 %v157, %v176
    %v179 = vtanh.pop %v178
    %vm180 = vcmp.eq.s32.totalorder %v68, 4
    %v181 = vsel %vm180, 1, 0
    %182 = vset.pattern.permute.xlu0 0
    %183 = vperm.xlu0 %182, %v181
    %v184 = vpop.permute.xlu0 %183
    %vm185 = vcmp.eq.s32.totalorder %v184, 1
    %v186 = vsel %vm185, %v179, %v155
    %s187 = scalar_lea.vmem [#allocation2], 32
    %v188 = vld [vmem:[%s187] sm:$0xff]
    %189 = vmatpush.msra.mxu0 %v84
    %190 = vmatpush.msra.mxu0 %v83
    %191 = vmatpush.msra.mxu0 %v82
    %192 = vmatpush.msra.mxu0 %v81
    %193 = vmatpush.msra.mxu0 %v80
    %194 = vmatpush.msra.mxu0 %v79
    %195 = vmatpush.msra.mxu0 %v78
    %196 = vmatpush.msra.mxu0 %v77
    %197 = vmatpush.msra.mxu0 %v76
    %198 = vmatpush.msra.mxu0 %v75
    %199 = vmatpush.msra.mxu0 %v74
    %200 = vmatpush.msra.mxu0 %v73
    %201 = vmatpush.msra.mxu0 %v72
    %202 = vmatpush.msra.mxu0 %v71
    %203 = vmatpush.msra.mxu0 %v70
    %204 = vmatpush.msra.mxu0 %v69
    %205 = vmatmul.f32.gmra.mxu0 %v179
    %v206 = vpop.f32.mrf.mxu0
    %v207 = vadd.f32 0.0, %v206
    %208 = vdwg.mxu0
    %v209 = vadd.f32 %v188, %v207
    %v210 = vtanh.pop %v209
    %vm211 = vcmp.eq.s32.totalorder %v68, 5
    %v212 = vsel %vm211, 1, 0
    %213 = vset.pattern.permute.xlu0 0
    %214 = vperm.xlu0 %213, %v212
    %v215 = vpop.permute.xlu0 %214
    %vm216 = vcmp.eq.s32.totalorder %v215, 1
    %v217 = vsel %vm216, %v210, %v186
    %s218 = scalar_lea.vmem [#allocation2], 40
    %v219 = vld [vmem:[%s218] sm:$0xff]
    %220 = vmatpush.msra.mxu0 %v84
    %221 = vmatpush.msra.mxu0 %v83
    %222 = vmatpush.msra.mxu0 %v82
    %223 = vmatpush.msra.mxu0 %v81
    %224 = vmatpush.msra.mxu0 %v80
    %225 = vmatpush.msra.mxu0 %v79
    %226 = vmatpush.msra.mxu0 %v78
    %227 = vmatpush.msra.mxu0 %v77
    %228 = vmatpush.msra.mxu0 %v76
    %229 = vmatpush.msra.mxu0 %v75
    %230 = vmatpush.msra.mxu0 %v74
    %231 = vmatpush.msra.mxu0 %v73
    %232 = vmatpush.msra.mxu0 %v72
    %233 = vmatpush.msra.mxu0 %v71
    %234 = vmatpush.msra.mxu0 %v70
    %235 = vmatpush.msra.mxu0 %v69
    %236 = vmatmul.f32.gmra.mxu0 %v210
    %v237 = vpop.f32.mrf.mxu0
    %v238 = vadd.f32 0.0, %v237
    %239 = vdwg.mxu0
    %v240 = vadd.f32 %v219, %v238
    %v241 = vtanh.pop %v240
    %vm242 = vcmp.eq.s32.totalorder %v68, 6
    %v243 = vsel %vm242, 1, 0
    %244 = vset.pattern.permute.xlu0 0
    %245 = vperm.xlu0 %244, %v243
    %v246 = vpop.permute.xlu0 %245
    %vm247 = vcmp.eq.s32.totalorder %v246, 1
    %v248 = vsel %vm247, %v241, %v217
    %s249 = scalar_lea.vmem [#allocation2], 48
    %v250 = vld [vmem:[%s249] sm:$0xff]
    %251 = vmatpush.msra.mxu0 %v84
    %252 = vmatpush.msra.mxu0 %v83
    %253 = vmatpush.msra.mxu0 %v82
    %254 = vmatpush.msra.mxu0 %v81
    %255 = vmatpush.msra.mxu0 %v80
    %256 = vmatpush.msra.mxu0 %v79
    %257 = vmatpush.msra.mxu0 %v78
    %258 = vmatpush.msra.mxu0 %v77
    %259 = vmatpush.msra.mxu0 %v76
    %260 = vmatpush.msra.mxu0 %v75
    %261 = vmatpush.msra.mxu0 %v74
    %262 = vmatpush.msra.mxu0 %v73
    %263 = vmatpush.msra.mxu0 %v72
    %264 = vmatpush.msra.mxu0 %v71
    %265 = vmatpush.msra.mxu0 %v70
    %266 = vmatpush.msra.mxu0 %v69
    %267 = vmatmul.f32.gmra.mxu0 %v241
    %v268 = vpop.f32.mrf.mxu0
    %v269 = vadd.f32 0.0, %v268
    %270 = vdwg.mxu0
    %v271 = vadd.f32 %v250, %v269
    %v272 = vtanh.pop %v271
    %vm273 = vcmp.eq.s32.totalorder %v68, 7
    %v274 = vsel %vm273, 1, 0
    %275 = vset.pattern.permute.xlu0 0
    %276 = vperm.xlu0 %275, %v274
    %v277 = vpop.permute.xlu0 %276
    %vm278 = vcmp.eq.s32.totalorder %v277, 1
    %v279 = vsel %vm278, %v272, %v248
    %s280 = scalar_lea.vmem [#allocation2], 56
    %v281 = vld [vmem:[%s280] sm:$0xff]
    %282 = vmatpush.msra.mxu0 %v84
    %283 = vmatpush.msra.mxu0 %v83
    %284 = vmatpush.msra.mxu0 %v82
    %285 = vmatpush.msra.mxu0 %v81
    %286 = vmatpush.msra.mxu0 %v80
    %287 = vmatpush.msra.mxu0 %v79
    %288 = vmatpush.msra.mxu0 %v78
    %289 = vmatpush.msra.mxu0 %v77
    %290 = vmatpush.msra.mxu0 %v76
    %291 = vmatpush.msra.mxu0 %v75
    %292 = vmatpush.msra.mxu0 %v74
    %293 = vmatpush.msra.mxu0 %v73
    %294 = vmatpush.msra.mxu0 %v72
    %295 = vmatpush.msra.mxu0 %v71
    %296 = vmatpush.msra.mxu0 %v70
    %297 = vmatpush.msra.mxu0 %v69
    %298 = vmatmul.f32.gmra.mxu0 %v272
    %v299 = vpop.f32.mrf.mxu0
    %v300 = vadd.f32 0.0, %v299
    %301 = vdwg.mxu0
    %v302 = vadd.f32 %v281, %v300
    %v303 = vtanh.pop %v302
    %vm304 = vcmp.eq.s32.totalorder %v68, 8
    %v305 = vsel %vm304, 1, 0
    %306 = vset.pattern.permute.xlu0 0
    %307 = vperm.xlu0 %306, %v305
    %v308 = vpop.permute.xlu0 %307
    %vm309 = vcmp.eq.s32.totalorder %v308, 1
    %v310 = vsel %vm309, %v303, %v279
    %v311 = vld [vmem:[#allocation7] sm:$0xff]
    %v312 = vld [vmem:[#allocation7 + $0x8] sm:$0xff]
    %v313 = vld [vmem:[#allocation7 + $0x10] sm:$0xff]
    %v314 = vld [vmem:[#allocation7 + $0x18] sm:$0xff]
    %v315 = vld [vmem:[#allocation7 + $0x20] sm:$0xff]
    %v316 = vld [vmem:[#allocation7 + $0x28] sm:$0xff]
    %v317 = vld [vmem:[#allocation7 + $0x30] sm:$0xff]
    %v318 = vld [vmem:[#allocation7 + $0x38] sm:$0xff]
    %v319 = vld [vmem:[#allocation7 + $0x40] sm:$0xff]
    %v320 = vld [vmem:[#allocation7 + $0x48] sm:$0xff]
    %v321 = vld [vmem:[#allocation7 + $0x50] sm:$0xff]
    %v322 = vld [vmem:[#allocation7 + $0x58] sm:$0xff]
    %v323 = vld [vmem:[#allocation7 + $0x60] sm:$0xff]
    %v324 = vld [vmem:[#allocation7 + $0x68] sm:$0xff]
    %v325 = vld [vmem:[#allocation7 + $0x70] sm:$0xff]
    %v326 = vld [vmem:[#allocation7 + $0x78] sm:$0xff]
    %v327 = vld [vmem:[%s4] sm:$0x1]
    %v329 = vperm.slane %v327, 0
    %331 = vmatpush.msra.mxu0 %v326
    %332 = vmatpush.msra.mxu0 %v325
    %333 = vmatpush.msra.mxu0 %v324
    %334 = vmatpush.msra.mxu0 %v323
    %335 = vmatpush.msra.mxu0 %v322
    %336 = vmatpush.msra.mxu0 %v321
    %337 = vmatpush.msra.mxu0 %v320
    %338 = vmatpush.msra.mxu0 %v319
    %339 = vmatpush.msra.mxu0 %v318
    %340 = vmatpush.msra.mxu0 %v317
    %341 = vmatpush.msra.mxu0 %v316
    %342 = vmatpush.msra.mxu0 %v315
    %343 = vmatpush.msra.mxu0 %v314
    %344 = vmatpush.msra.mxu0 %v313
    %345 = vmatpush.msra.mxu0 %v312
    %346 = vmatpush.msra.mxu0 %v311
    %347 = vmatmul.f32.gmra.mxu0 %v310
    %v348 = vpop.f32.mrf.mxu0
    %v349 = vadd.f32 %v329, %v348
    %350 = vdwg.mxu0
    %351 = vst [vmem:[#allocation8] sm:$0xff] %v349
    // Predicated region
    $region34: #{tpu_custom_call.1} parent=1 // pred_check
      _
    $region35: #{tpu_custom_call.1} parent=1 // pred_check_branch
      %353 = sbr.rel (0) target = $region37
    $region36: #{tpu_custom_call.1} parent=1 // pred_region
      %355 = vsyncadd [#allocation4], 0
      %s357 = sshll.u32 [#allocation8], 4
      %s358 = int_to_ptr.vmem [resolvable:$true] %s357
      %s359 = sshll.u32 %s5, 4
      %s360 = int_to_ptr.hbm [resolvable:$true] %s359
      %362 = dma.vmem_to_hbm [thread:$0]  %s358, 128, %s360, [#allocation4]
    $region37: #{tpu_custom_call.1} parent=1 // pred_fallthru
      _
    // Predicated region
    $region38: #{tpu_custom_call.1} parent=1 // pred_check
      _
    $region39: #{tpu_custom_call.1} parent=1 // pred_check_branch
      %364 = sbr.rel (0) target = $region41
    $region40: #{tpu_custom_call.1} parent=1 // pred_region
      %366 = dma.done [#allocation4], 128
    $region41: #{tpu_custom_call.1} parent=1 // pred_fallthru
      _
    %367 = vsyncpa [#allocation3], 1
    %368 = vsyncpa [#allocation6], 1
    %369 = vsyncpa [#allocation4], 1

</llo_original>
